<compile_context>
chip_gen: v7x
topology: tpu7x:2x2x1
jax: 0.10.0
libtpu: 0.0.40
codegen_flags: <defaults>
</compile_context>

<pallas_src>
import functools

import jax
import jax.numpy as jnp
from jax.experimental import pallas as pl
from jax.experimental.pallas import tpu as pltpu

LANE = 128
SUBLANE = 8


def _rmse_partial_kernel(x_ref, y_ref, o_ref, *, n, block_rows,
                         blocks_per_core, needs_mask):
    p = pl.program_id(0)   # parallel axis (per-core partial accumulator)
    i = pl.program_id(1)   # arbitrary (reduction) axis

    @pl.when(i == 0)
    def _():
        o_ref[...] = jnp.zeros_like(o_ref)

    # Upcast to f32 inside the kernel (HBM traffic stays in the native dtype).
    xv = x_ref[...].astype(jnp.float32)
    yv = y_ref[...].astype(jnp.float32)
    d = xv - yv
    sq = d * d

    if needs_mask:
        # Zero out elements past n: the Pallas-padded tail of a partial last
        # block and any clamped (duplicate) blocks past the end of the slab.
        block_elems = block_rows * LANE
        base = (p * blocks_per_core + i) * block_elems   # logical, unclamped
        r = jax.lax.broadcasted_iota(jnp.int32, sq.shape, 0)
        c = jax.lax.broadcasted_iota(jnp.int32, sq.shape, 1)
        local = r * LANE + c
        sq = jnp.where(local < (n - base), sq, 0.0)

    # (block_rows,128) -> (block_rows//8, 8, 128); leading-axis sum is pure
    # VPU vreg adds (no XLU / scalar round trip per step).
    o_ref[...] += jnp.sum(sq.reshape(-1, SUBLANE, LANE), axis=0)


def rmse_loss(x, y, reduction="mean", max_block_rows=2048):
    """Pallas equivalent of RMSELoss(reduction).forward(x, y)."""
    assert x.shape == y.shape, "input and target must have the same shape"
    n = int(x.size)
    assert n > 0

    # Flatten in native dtype; pad with zeros only if needed to form a
    # [rows, 128] slab with rows >= 8 (zeros contribute 0 to the SSE).
    n_slab = max(SUBLANE * LANE, LANE * pl.cdiv(n, LANE))

    def prep(a):
        flat = a.reshape(-1)
        if n_slab != n:
            flat = jnp.pad(flat, (0, n_slab - n))
        return flat.reshape(-1, LANE)

    xs, ys = prep(x), prep(y)
    rows = n_slab // LANE                                   # >= 8

    # Block rows: multiple of 8, as large as possible up to max_block_rows.
    block_rows = min(int(max_block_rows), (rows // SUBLANE) * SUBLANE)
    tiles_total = pl.cdiv(rows, block_rows)

    # Split the reduction across 2 partial accumulators when there is more
    # than one block (v7x: one per TensorCore; harmless elsewhere).
    num_cores = 2 if tiles_total >= 2 else 1
    blocks_per_core = pl.cdiv(tiles_total, num_cores)
    needs_mask = (num_cores * blocks_per_core * block_rows) != rows

    def in_index_map(p, i):
        # Clamp so the DMA never goes out of bounds; clamped duplicate blocks
        # are fully zeroed by the in-kernel mask.
        return (jnp.minimum(p * blocks_per_core + i, tiles_total - 1), 0)

    partials = pl.pallas_call(
        functools.partial(
            _rmse_partial_kernel,
            n=n,
            block_rows=block_rows,
            blocks_per_core=blocks_per_core,
            needs_mask=needs_mask,
        ),
        out_shape=jax.ShapeDtypeStruct((num_cores, SUBLANE, LANE), jnp.float32),
        grid_spec=pltpu.PrefetchScalarGridSpec(
            num_scalar_prefetch=0,
            grid=(num_cores, blocks_per_core),
            in_specs=[
                pl.BlockSpec((block_rows, LANE), in_index_map),
                pl.BlockSpec((block_rows, LANE), in_index_map),
            ],
            out_specs=pl.BlockSpec((None, SUBLANE, LANE),
                                   lambda p, i: (p, 0, 0)),
        ),
        compiler_params=pltpu.CompilerParams(
            dimension_semantics=("parallel", "arbitrary")),
    )(xs, ys)

    total = jnp.sum(partials)
    if reduction == "mean":
        return jnp.sqrt(total / jnp.float32(n))
    elif reduction == "sum":
        return jnp.sqrt(total)
    else:
        # TODO(synk): reduction='none' (elementwise sqrt of squared error) is
        # not implemented; only 'mean' (default) and 'sum' are supported.
        raise ValueError(f"unsupported reduction: {reduction}")


if __name__ == "__main__":
    key = jax.random.PRNGKey(0)
    k1, k2, k3, k4, k5, k6 = jax.random.split(key, 6)

    # 1) Shape consistent with a property-prediction regression head.
    x = jax.random.normal(k1, (2, 4, 16, 16), dtype=jnp.float32)
    y = jax.random.normal(k2, (2, 4, 16, 16), dtype=jnp.float32)
    loss = rmse_loss(x, y, reduction="mean")
    jax.block_until_ready(loss)
    ref = jnp.sqrt(jnp.mean((x - y) ** 2))
    assert jnp.allclose(loss, ref, rtol=1e-5, atol=1e-6), (loss, ref)

    # 2) Exercise the multi-block / parallel / tail-mask / clamp paths with a
    #    small shape by shrinking the block size.
    x2 = jax.random.normal(k3, (17, 128), dtype=jnp.float32)
    y2 = jax.random.normal(k4, (17, 128), dtype=jnp.float32)
    loss2 = rmse_loss(x2, y2, reduction="mean", max_block_rows=8)
    jax.block_until_ready(loss2)
    ref2 = jnp.sqrt(jnp.mean((x2 - y2) ** 2))
    assert jnp.allclose(loss2, ref2, rtol=1e-5, atol=1e-6), (loss2, ref2)

    # 3) Ragged size (needs lane padding) + 'sum' reduction.
    x3 = jax.random.normal(k5, (3, 5, 7), dtype=jnp.float32)
    y3 = jax.random.normal(k6, (3, 5, 7), dtype=jnp.float32)
    loss3 = rmse_loss(x3, y3, reduction="sum")
    jax.block_until_ready(loss3)
    ref3 = jnp.sqrt(jnp.sum((x3 - y3) ** 2))
    assert jnp.allclose(loss3, ref3, rtol=1e-5, atol=1e-6), (loss3, ref3)

    print("KERNEL_OK")
</pallas_src>

<mosaic_0001>
module attributes {stable_mosaic.version = 11 : i64} {
  func.func @_rmse_partial_kernel(%arg0: i32, %arg1: i32, %arg2: memref<16x128xf32, #tpu.memory_space<vmem>>, %arg3: memref<16x128xf32, #tpu.memory_space<vmem>>, %arg4: memref<1x8x128xf32, #tpu.memory_space<vmem>>) attributes {dimension_semantics = [#tpu.dimension_semantics<parallel>, #tpu.dimension_semantics<arbitrary>], iteration_bounds = array<i64: 1, 1>, scalar_prefetch = 0 : i64, scratch_operands = 0 : i64, tpu.core_type = #tpu.core_type<tc>, window_params = [{transform_indices = @transform_0, window_bounds = array<i64: 16, 128>}, {transform_indices = @transform_1, window_bounds = array<i64: 16, 128>}, {transform_indices = @transform_2, window_bounds = array<i64: 1, 8, 128>}]} {
    %c0_i32 = arith.constant 0 : i32
    %0 = arith.cmpi eq, %arg1, %c0_i32 : i32
    %1 = arith.extui %0 : i1 to i32
    %c0_i32_0 = arith.constant 0 : i32
    %2 = arith.cmpi ne, %1, %c0_i32_0 : i32
    scf.if %2 {
      %cst_10 = arith.constant 0.000000e+00 : f32
      %15 = vector.broadcast %cst_10 : f32 to vector<8x128xf32>
      %c0_11 = arith.constant 0 : index
      %c0_12 = arith.constant 0 : index
      %c0_13 = arith.constant 0 : index
      %16 = vector.load %arg4[%c0_11, %c0_12, %c0_13] : memref<1x8x128xf32, #tpu.memory_space<vmem>>, vector<1x8x128xf32>
      %17 = vector.shape_cast %16 : vector<1x8x128xf32> to vector<8x128xf32>
      %18 = vector.shape_cast %15 : vector<8x128xf32> to vector<1x8x128xf32>
      tpu.vector_store %arg4[%c0_11, %c0_12, %c0_13], %18 {strides = array<i32>} : memref<1x8x128xf32, #tpu.memory_space<vmem>>, vector<1x8x128xf32>,
    } else {
    }
    %c0 = arith.constant 0 : index
    %c0_1 = arith.constant 0 : index
    %3 = vector.load %arg2[%c0, %c0_1] : memref<16x128xf32, #tpu.memory_space<vmem>>, vector<16x128xf32>
    %c0_2 = arith.constant 0 : index
    %c0_3 = arith.constant 0 : index
    %4 = vector.load %arg3[%c0_2, %c0_3] : memref<16x128xf32, #tpu.memory_space<vmem>>, vector<16x128xf32>
    %5 = arith.subf %3, %4 : vector<16x128xf32>
    %6 = arith.mulf %5, %5 : vector<16x128xf32>
    %c0_4 = arith.constant 0 : index
    %c0_5 = arith.constant 0 : index
    %c0_6 = arith.constant 0 : index
    %7 = vector.load %arg4[%c0_4, %c0_5, %c0_6] : memref<1x8x128xf32, #tpu.memory_space<vmem>>, vector<1x8x128xf32>
    %8 = vector.shape_cast %7 : vector<1x8x128xf32> to vector<8x128xf32>
    %9 = vector.shape_cast %6 : vector<16x128xf32> to vector<2x8x128xf32>
    %cst = arith.constant dense<0.000000e+00> : vector<8x128xf32>
    %10 = vector.multi_reduction <add>, %9, %cst [0] : vector<2x8x128xf32> to vector<8x128xf32>
    %11 = arith.addf %8, %10 : vector<8x128xf32>
    %c0_7 = arith.constant 0 : index
    %c0_8 = arith.constant 0 : index
    %c0_9 = arith.constant 0 : index
    %12 = vector.load %arg4[%c0_7, %c0_8, %c0_9] : memref<1x8x128xf32, #tpu.memory_space<vmem>>, vector<1x8x128xf32>
    %13 = vector.shape_cast %12 : vector<1x8x128xf32> to vector<8x128xf32>
    %14 = vector.shape_cast %11 : vector<8x128xf32> to vector<1x8x128xf32>
    tpu.vector_store %arg4[%c0_7, %c0_8, %c0_9], %14 {strides = array<i32>} : memref<1x8x128xf32, #tpu.memory_space<vmem>>, vector<1x8x128xf32>,
    return
  }
  func.func @transform_0(%arg0: i32, %arg1: i32) -> (i32, i32) {
    %c1_i32 = arith.constant 1 : i32
    %0 = arith.muli %arg0, %c1_i32 : i32
    %1 = arith.addi %0, %arg1 : i32
    %c0_i32 = arith.constant 0 : i32
    %2 = arith.minsi %1, %c0_i32 : i32
    %c0_i32_0 = arith.constant 0 : i32
    %c0_i32_1 = arith.constant 0 : i32
    return %2, %c0_i32_0 : i32, i32
  }
  func.func @transform_1(%arg0: i32, %arg1: i32) -> (i32, i32) {
    %c1_i32 = arith.constant 1 : i32
    %0 = arith.muli %arg0, %c1_i32 : i32
    %1 = arith.addi %0, %arg1 : i32
    %c0_i32 = arith.constant 0 : i32
    %2 = arith.minsi %1, %c0_i32 : i32
    %c0_i32_0 = arith.constant 0 : i32
    %c0_i32_1 = arith.constant 0 : i32
    return %2, %c0_i32_0 : i32, i32
  }
  func.func @transform_2(%arg0: i32, %arg1: i32) -> (i32, i32, i32) {
    %c0_i32 = arith.constant 0 : i32
    %c0_i32_0 = arith.constant 0 : i32
    %c0_i32_1 = arith.constant 0 : i32
    return %arg0, %c0_i32, %c0_i32_0 : i32, i32, i32
  }
}

</mosaic_0001>

<llo_original>
// kernel: tpu_custom_call.1
$region0: #{tpu_custom_call.1}
  #allocation0 [shape = 'u32[]', space=smem, size = 0x4, offset = 0x4, fixed_abs, tag = 'smem constant byte address 0x4 - core index']
  #allocation1 [shape = 'u32[144,128]{1,0:T(1,128)}', space=vmem, size = 0x12000, scoped, tag = 'internal scratch']
  %s0 = inlined_call_operand.hbm [shape: f32[16,128], index: 0, kind: input, shape index: {}]
  %s1 = inlined_call_operand.hbm [shape: f32[16,128], index: 1, kind: input, shape index: {}]
  %s2 = inlined_call_operand.hbm [shape: f32[1,8,128], index: 2, kind: output, shape index: {}]
  %s3 = sld [smem:[#allocation0]]
  $region30: #{tpu_custom_call.1} parent=0
    _
  %s5 = ssub.s32 1, %s3
  %s6 = scalar_select 0, %s5, %s3
  $region1: #{tpu_custom_call.1} parent=0
    #allocation2 [shape = 'u8[8192]{0}', space=vmem, size = 0x2000, scoped, tag = 'input window, operand 0, single buffered']
    #allocation3 [shape = 's32[1]{0}', space=sflag, size = 0x4, scoped, tag = 'scoped memory for tpu_custom_call.1']
    #allocation4 [shape = 's32[1]{0}', space=sflag, size = 0x4, scoped, tag = 'scoped memory for tpu_custom_call.1']
    #allocation5 [shape = 'u8[8192]{0}', space=vmem, size = 0x2000, scoped, tag = 'input window, operand 1, single buffered']
    #allocation6 [shape = 's32[1]{0}', space=sflag, size = 0x4, scoped, tag = 'scoped memory for tpu_custom_call.1']
    #allocation7 [shape = 'u8[4096]{0}', space=vmem, size = 0x1000, scoped, tag = 'output window, operand 0, single buffered']
    %7 = vsyncpa [#allocation3], 0
    %8 = vsyncpa [#allocation6], 0
    %9 = vsyncpa [#allocation4], 0
    // Predicated region
    $region2: #{tpu_custom_call.1} parent=1 // pred_check
      _
    $region3: #{tpu_custom_call.1} parent=1 // pred_check_branch
      %11 = sbr.rel (0) target = $region5
    $region4: #{tpu_custom_call.1} parent=1 // pred_region
      %s12 = sadd.s32 0, 0
      %p13 = scmp.lt.s32.totalorder %s12, 0
      %s14 = scalar_select %p13, %s12, 0
      %s15 = smul.u32 2, %s14
      %s17 = ssub.s32 256, 256
      %18 = vsyncadd [#allocation3], %s17
      %s19 = smul.addr %s15, 128
      %s20 = scalar_lea.hbm %s0, %s19
      %s21 = sshll.u32 [#allocation2], 4
      %s22 = int_to_ptr.vmem [resolvable:$true] %s21
      %27 = dma.hbm_to_vmem [thread:$0]  %s20, 256, %s22, [#allocation3], 128, 128, 8
    $region5: #{tpu_custom_call.1} parent=1 // pred_fallthru
      _
    // Predicated region
    $region6: #{tpu_custom_call.1} parent=1 // pred_check
      _
    $region7: #{tpu_custom_call.1} parent=1 // pred_check_branch
      %29 = sbr.rel (0) target = $region9
    $region8: #{tpu_custom_call.1} parent=1 // pred_region
      %s30 = sadd.s32 0, 0
      %p31 = scmp.lt.s32.totalorder %s30, 0
      %s32 = scalar_select %p31, %s30, 0
      %s33 = smul.u32 2, %s32
      %s35 = ssub.s32 256, 256
      %36 = vsyncadd [#allocation6], %s35
      %s37 = smul.addr %s33, 128
      %s38 = scalar_lea.hbm %s1, %s37
      %s39 = sshll.u32 [#allocation5], 4
      %s40 = int_to_ptr.vmem [resolvable:$true] %s39
      %45 = dma.hbm_to_vmem [thread:$0]  %s38, 256, %s40, [#allocation6], 128, 128, 8
    $region9: #{tpu_custom_call.1} parent=1 // pred_fallthru
      _
    // Predicated region
    $region10: #{tpu_custom_call.1} parent=1 // pred_check
      _
    $region11: #{tpu_custom_call.1} parent=1 // pred_check_branch
      %47 = sbr.rel (0) target = $region13
    $region12: #{tpu_custom_call.1} parent=1 // pred_region
      %48 = dma.done [#allocation3], 256
    $region13: #{tpu_custom_call.1} parent=1 // pred_fallthru
      _
    // Predicated region
    $region14: #{tpu_custom_call.1} parent=1 // pred_check
      _
    $region15: #{tpu_custom_call.1} parent=1 // pred_check_branch
      %50 = sbr.rel (0) target = $region17
    $region16: #{tpu_custom_call.1} parent=1 // pred_region
      %51 = dma.done [#allocation6], 256
    $region17: #{tpu_custom_call.1} parent=1 // pred_fallthru
      _
    %s52 = sadd.s32 0, 0
    %p53 = scmp.lt.s32.totalorder %s52, 0
    %s54 = scalar_select %p53, %s52, 0
    %s55 = smul.u32 2, %s54
    %s56 = sadd.s32 0, 0
    %p57 = scmp.lt.s32.totalorder %s56, 0
    %s58 = scalar_select %p57, %s56, 0
    %s59 = smul.u32 2, %s58
    %p60 = scmp.eq.s32.totalorder 0, 0
    // Predicated region
    $region18: #{tpu_custom_call.1} parent=1 // pred_check
      %p61 = pneg %p60
    $region19: #{tpu_custom_call.1} parent=1 // pred_check_branch
      %63 = sbr.rel (%p61) target = $region21
    $region20: #{tpu_custom_call.1} parent=1 // pred_region
      %64 = vst [vmem:[#allocation7] sm:$0xff] 0.0
    $region21: #{tpu_custom_call.1} parent=1 // pred_fallthru
      _
    %v65 = vld [vmem:[#allocation2] sm:$0xff]
    %v66 = vld [vmem:[#allocation2 + $0x8] sm:$0xff]
    %v67 = vld [vmem:[#allocation5] sm:$0xff]
    %v68 = vld [vmem:[#allocation5 + $0x8] sm:$0xff]
    %v69 = vsub.f32 %v65, %v67
    %v70 = vsub.f32 %v66, %v68
    %v71 = vmul.f32 %v69, %v69
    %v72 = vmul.f32 %v70, %v70
    %v73 = vld [vmem:[#allocation7] sm:$0xff]
    %v74 = vadd.f32 %v71, %v72
    %v75 = vadd.f32 %v73, %v74
    %76 = vst [vmem:[#allocation7] sm:$0xff] %v75
    // Predicated region
    $region22: #{tpu_custom_call.1} parent=1 // pred_check
      _
    $region23: #{tpu_custom_call.1} parent=1 // pred_check_branch
      %78 = sbr.rel (0) target = $region25
    $region24: #{tpu_custom_call.1} parent=1 // pred_region
      %s80 = ssub.s32 128, 128
      %81 = vsyncadd [#allocation4], %s80
      %s83 = sshll.u32 [#allocation7], 4
      %s84 = int_to_ptr.vmem [resolvable:$true] %s83
      %86 = dma.vmem_to_hbm [thread:$0]  %s84, 128, %s2, [#allocation4]
    $region25: #{tpu_custom_call.1} parent=1 // pred_fallthru
      _
    // Predicated region
    $region26: #{tpu_custom_call.1} parent=1 // pred_check
      _
    $region27: #{tpu_custom_call.1} parent=1 // pred_check_branch
      %88 = sbr.rel (0) target = $region29
    $region28: #{tpu_custom_call.1} parent=1 // pred_region
      %89 = dma.done [#allocation4], 128
    $region29: #{tpu_custom_call.1} parent=1 // pred_fallthru
      _
    %90 = vsyncpa [#allocation3], 1
    %91 = vsyncpa [#allocation6], 1
    %92 = vsyncpa [#allocation4], 1

</llo_original>
